<compile_context>
chip_gen: v7x
topology: tpu7x:2x2x1
jax: 0.10.0
libtpu: 0.0.40
codegen_flags: <defaults>
</compile_context>

<pallas_src>
import jax
import jax.numpy as jnp
from jax.experimental import pallas as pl
from jax.experimental.pallas import tpu as pltpu

_D_HID = 20
_LANES = 128
_BLOCK_ROWS = 1024  # (1024,128) f32 block = 512 KiB; double-buffered in+out ~= 2 MiB VMEM


def _mlp_kernel(w1_ref, b1_ref, w2_ref, b2_ref, x_ref, o_ref):
    # x_ref: (block_rows, 128) block in VMEM -- batch rows mapped to lanes.
    # w1_ref/b1_ref/w2_ref: (20,) f32 in SMEM; b2_ref: (1,) f32 in SMEM.
    # y[i] = sum_j relu(x[i]*w1[j] + b1[j]) * w2[j] + b2   (pure VPU work)
    x = x_ref[...].astype(jnp.float32)
    acc = jnp.full_like(x, b2_ref[0])
    for j in range(_D_HID):  # static unroll: ~5 VALU ops per hidden unit
        h = jnp.maximum(x * w1_ref[j] + b1_ref[j], 0.0)
        acc = acc + h * w2_ref[j]
    o_ref[...] = acc.astype(o_ref.dtype)


def mlp_forward_lane_dense(x2d, w1, b1, w2, b2):
    """Core gridded kernel: x2d is (rows, 128) with the batch already lane-dense."""
    rows, lanes = x2d.shape
    assert lanes == _LANES
    block_rows = min(rows, _BLOCK_ROWS)   # full-array block for small N; 1024-row tiles else
    grid = (pl.cdiv(rows, block_rows),)

    n_elem = rows * lanes
    cost = pl.CostEstimate(
        flops=5 * _D_HID * n_elem,
        transcendentals=0,
        bytes_accessed=2 * x2d.dtype.itemsize * n_elem + 4 * (3 * _D_HID + 1),
    )

    return pl.pallas_call(
        _mlp_kernel,
        out_shape=jax.ShapeDtypeStruct((rows, lanes), x2d.dtype),
        grid=grid,
        in_specs=[
            pl.BlockSpec(memory_space=pltpu.MemorySpace.SMEM),      # w1 (20,)
            pl.BlockSpec(memory_space=pltpu.MemorySpace.SMEM),      # b1 (20,)
            pl.BlockSpec(memory_space=pltpu.MemorySpace.SMEM),      # w2 (20,)
            pl.BlockSpec(memory_space=pltpu.MemorySpace.SMEM),      # b2 (1,)
            pl.BlockSpec((block_rows, _LANES), lambda i: (i, 0)),   # x block
        ],
        out_specs=pl.BlockSpec((block_rows, _LANES), lambda i: (i, 0)),
        compiler_params=pltpu.CompilerParams(
            dimension_semantics=("parallel",),   # v7x: both TensorCores split the row blocks
        ),
        cost_estimate=cost,
    )(w1.reshape(-1), b1.reshape(-1), w2.reshape(-1), b2.reshape(-1), x2d)


@jax.jit
def mlp_forward(x, w1, b1, w2, b2):
    """x: (N, 1) f32; w1: (1, 20); b1: (1, 20); w2: (20, 1); b2: (1, 1)."""
    n = x.shape[0]
    rows = pl.cdiv(n, _LANES)
    n_pad = rows * _LANES
    # Minimal lane-dense relayout (row-major, element order preserved): pad only the
    # last partial 128-lane row.  Persistent pipelines should keep activations in the
    # (rows, 128) layout and call mlp_forward_lane_dense directly (no pad/slice at all).
    x2d = jnp.pad(x.reshape(-1), (0, n_pad - n)).reshape(rows, _LANES)
    out = mlp_forward_lane_dense(x2d, w1, b1, w2, b2)
    return out.reshape(-1)[:n][:, None]


def init_params(key):
    """Deterministic init mimicking torch.nn.Linear default U(-1/sqrt(fan_in), +)."""
    k1, k2, k3, k4 = jax.random.split(key, 4)
    d_in, d_hid, d_out = 1, _D_HID, 1
    bound1 = 1.0 / jnp.sqrt(jnp.float32(d_in))
    bound2 = 1.0 / jnp.sqrt(jnp.float32(d_hid))
    # Stored as (in, out) == W.T relative to PyTorch's (out, in).
    w1 = jax.random.uniform(k1, (d_in, d_hid), jnp.float32, -bound1, bound1)
    b1 = jax.random.uniform(k2, (1, d_hid), jnp.float32, -bound1, bound1)
    w2 = jax.random.uniform(k3, (d_hid, d_out), jnp.float32, -bound2, bound2)
    b2 = jax.random.uniform(k4, (1, d_out), jnp.float32, -bound2, bound2)
    return w1, b1, w2, b2


if __name__ == "__main__":
    key = jax.random.PRNGKey(0)
    w1, b1, w2, b2 = init_params(key)

    # Same input as the PyTorch script: x = linspace(-1, 1, 1000).unsqueeze(1)
    x = jnp.linspace(-1.0, 1.0, 1000, dtype=jnp.float32)[:, None]

    y = mlp_forward(x, w1, b1, w2, b2)
    jax.block_until_ready(y)

    # Cross-check against plain-JAX reference of the PyTorch forward.
    y_ref = jnp.maximum(x @ w1 + b1, 0.0) @ w2 + b2
    assert y.shape == (1000, 1)
    assert jnp.allclose(y, y_ref, atol=1e-5, rtol=1e-5)
    print("KERNEL_OK")
</pallas_src>

<mosaic_0001>
module attributes {stable_mosaic.version = 11 : i64} {
  func.func @_mlp_kernel(%arg0: i32, %arg1: memref<20xf32, #tpu.memory_space<smem>>, %arg2: memref<20xf32, #tpu.memory_space<smem>>, %arg3: memref<20xf32, #tpu.memory_space<smem>>, %arg4: memref<1xf32, #tpu.memory_space<smem>>, %arg5: memref<8x128xf32, #tpu.memory_space<vmem>>, %arg6: memref<8x128xf32, #tpu.memory_space<vmem>>) attributes {dimension_semantics = [#tpu.dimension_semantics<parallel>], iteration_bounds = array<i64: 1>, scalar_prefetch = 0 : i64, scratch_operands = 0 : i64, tpu.core_type = #tpu.core_type<tc>, window_params = [{transform_indices = @transform_0, window_bounds = array<i64: 20>}, {transform_indices = @transform_1, window_bounds = array<i64: 20>}, {transform_indices = @transform_2, window_bounds = array<i64: 20>}, {transform_indices = @transform_3, window_bounds = array<i64: 1>}, {transform_indices = @transform_4, window_bounds = array<i64: 8, 128>}, {transform_indices = @transform_5, window_bounds = array<i64: 8, 128>}]} {
    %c0 = arith.constant 0 : index
    %c0_0 = arith.constant 0 : index
    %0 = vector.load %arg5[%c0, %c0_0] : memref<8x128xf32, #tpu.memory_space<vmem>>, vector<8x128xf32>
    %c0_1 = arith.constant 0 : index
    %1 = memref.load %arg4[%c0_1] : memref<1xf32, #tpu.memory_space<smem>>
    %2 = vector.broadcast %1 : f32 to vector<8x128xf32>
    %c0_2 = arith.constant 0 : index
    %3 = memref.load %arg1[%c0_2] : memref<20xf32, #tpu.memory_space<smem>>
    %4 = vector.broadcast %3 : f32 to vector<8x128xf32>
    %5 = arith.mulf %0, %4 : vector<8x128xf32>
    %c0_3 = arith.constant 0 : index
    %6 = memref.load %arg2[%c0_3] : memref<20xf32, #tpu.memory_space<smem>>
    %7 = vector.broadcast %6 : f32 to vector<8x128xf32>
    %8 = arith.addf %5, %7 : vector<8x128xf32>
    %cst = arith.constant 0.000000e+00 : f32
    %9 = vector.broadcast %cst : f32 to vector<8x128xf32>
    %10 = arith.maximumf %8, %9 : vector<8x128xf32>
    %c0_4 = arith.constant 0 : index
    %11 = memref.load %arg3[%c0_4] : memref<20xf32, #tpu.memory_space<smem>>
    %12 = vector.broadcast %11 : f32 to vector<8x128xf32>
    %13 = arith.mulf %10, %12 : vector<8x128xf32>
    %14 = arith.addf %2, %13 : vector<8x128xf32>
    %c1 = arith.constant 1 : index
    %15 = memref.load %arg1[%c1] : memref<20xf32, #tpu.memory_space<smem>>
    %16 = vector.broadcast %15 : f32 to vector<8x128xf32>
    %17 = arith.mulf %0, %16 : vector<8x128xf32>
    %c1_5 = arith.constant 1 : index
    %18 = memref.load %arg2[%c1_5] : memref<20xf32, #tpu.memory_space<smem>>
    %19 = vector.broadcast %18 : f32 to vector<8x128xf32>
    %20 = arith.addf %17, %19 : vector<8x128xf32>
    %cst_6 = arith.constant 0.000000e+00 : f32
    %21 = vector.broadcast %cst_6 : f32 to vector<8x128xf32>
    %22 = arith.maximumf %20, %21 : vector<8x128xf32>
    %c1_7 = arith.constant 1 : index
    %23 = memref.load %arg3[%c1_7] : memref<20xf32, #tpu.memory_space<smem>>
    %24 = vector.broadcast %23 : f32 to vector<8x128xf32>
    %25 = arith.mulf %22, %24 : vector<8x128xf32>
    %26 = arith.addf %14, %25 : vector<8x128xf32>
    %c2 = arith.constant 2 : index
    %27 = memref.load %arg1[%c2] : memref<20xf32, #tpu.memory_space<smem>>
    %28 = vector.broadcast %27 : f32 to vector<8x128xf32>
    %29 = arith.mulf %0, %28 : vector<8x128xf32>
    %c2_8 = arith.constant 2 : index
    %30 = memref.load %arg2[%c2_8] : memref<20xf32, #tpu.memory_space<smem>>
    %31 = vector.broadcast %30 : f32 to vector<8x128xf32>
    %32 = arith.addf %29, %31 : vector<8x128xf32>
    %cst_9 = arith.constant 0.000000e+00 : f32
    %33 = vector.broadcast %cst_9 : f32 to vector<8x128xf32>
    %34 = arith.maximumf %32, %33 : vector<8x128xf32>
    %c2_10 = arith.constant 2 : index
    %35 = memref.load %arg3[%c2_10] : memref<20xf32, #tpu.memory_space<smem>>
    %36 = vector.broadcast %35 : f32 to vector<8x128xf32>
    %37 = arith.mulf %34, %36 : vector<8x128xf32>
    %38 = arith.addf %26, %37 : vector<8x128xf32>
    %c3 = arith.constant 3 : index
    %39 = memref.load %arg1[%c3] : memref<20xf32, #tpu.memory_space<smem>>
    %40 = vector.broadcast %39 : f32 to vector<8x128xf32>
    %41 = arith.mulf %0, %40 : vector<8x128xf32>
    %c3_11 = arith.constant 3 : index
    %42 = memref.load %arg2[%c3_11] : memref<20xf32, #tpu.memory_space<smem>>
    %43 = vector.broadcast %42 : f32 to vector<8x128xf32>
    %44 = arith.addf %41, %43 : vector<8x128xf32>
    %cst_12 = arith.constant 0.000000e+00 : f32
    %45 = vector.broadcast %cst_12 : f32 to vector<8x128xf32>
    %46 = arith.maximumf %44, %45 : vector<8x128xf32>
    %c3_13 = arith.constant 3 : index
    %47 = memref.load %arg3[%c3_13] : memref<20xf32, #tpu.memory_space<smem>>
    %48 = vector.broadcast %47 : f32 to vector<8x128xf32>
    %49 = arith.mulf %46, %48 : vector<8x128xf32>
    %50 = arith.addf %38, %49 : vector<8x128xf32>
    %c4 = arith.constant 4 : index
    %51 = memref.load %arg1[%c4] : memref<20xf32, #tpu.memory_space<smem>>
    %52 = vector.broadcast %51 : f32 to vector<8x128xf32>
    %53 = arith.mulf %0, %52 : vector<8x128xf32>
    %c4_14 = arith.constant 4 : index
    %54 = memref.load %arg2[%c4_14] : memref<20xf32, #tpu.memory_space<smem>>
    %55 = vector.broadcast %54 : f32 to vector<8x128xf32>
    %56 = arith.addf %53, %55 : vector<8x128xf32>
    %cst_15 = arith.constant 0.000000e+00 : f32
    %57 = vector.broadcast %cst_15 : f32 to vector<8x128xf32>
    %58 = arith.maximumf %56, %57 : vector<8x128xf32>
    %c4_16 = arith.constant 4 : index
    %59 = memref.load %arg3[%c4_16] : memref<20xf32, #tpu.memory_space<smem>>
    %60 = vector.broadcast %59 : f32 to vector<8x128xf32>
    %61 = arith.mulf %58, %60 : vector<8x128xf32>
    %62 = arith.addf %50, %61 : vector<8x128xf32>
    %c5 = arith.constant 5 : index
    %63 = memref.load %arg1[%c5] : memref<20xf32, #tpu.memory_space<smem>>
    %64 = vector.broadcast %63 : f32 to vector<8x128xf32>
    %65 = arith.mulf %0, %64 : vector<8x128xf32>
    %c5_17 = arith.constant 5 : index
    %66 = memref.load %arg2[%c5_17] : memref<20xf32, #tpu.memory_space<smem>>
    %67 = vector.broadcast %66 : f32 to vector<8x128xf32>
    %68 = arith.addf %65, %67 : vector<8x128xf32>
    %cst_18 = arith.constant 0.000000e+00 : f32
    %69 = vector.broadcast %cst_18 : f32 to vector<8x128xf32>
    %70 = arith.maximumf %68, %69 : vector<8x128xf32>
    %c5_19 = arith.constant 5 : index
    %71 = memref.load %arg3[%c5_19] : memref<20xf32, #tpu.memory_space<smem>>
    %72 = vector.broadcast %71 : f32 to vector<8x128xf32>
    %73 = arith.mulf %70, %72 : vector<8x128xf32>
    %74 = arith.addf %62, %73 : vector<8x128xf32>
    %c6 = arith.constant 6 : index
    %75 = memref.load %arg1[%c6] : memref<20xf32, #tpu.memory_space<smem>>
    %76 = vector.broadcast %75 : f32 to vector<8x128xf32>
    %77 = arith.mulf %0, %76 : vector<8x128xf32>
    %c6_20 = arith.constant 6 : index
    %78 = memref.load %arg2[%c6_20] : memref<20xf32, #tpu.memory_space<smem>>
    %79 = vector.broadcast %78 : f32 to vector<8x128xf32>
    %80 = arith.addf %77, %79 : vector<8x128xf32>
    %cst_21 = arith.constant 0.000000e+00 : f32
    %81 = vector.broadcast %cst_21 : f32 to vector<8x128xf32>
    %82 = arith.maximumf %80, %81 : vector<8x128xf32>
    %c6_22 = arith.constant 6 : index
    %83 = memref.load %arg3[%c6_22] : memref<20xf32, #tpu.memory_space<smem>>
    %84 = vector.broadcast %83 : f32 to vector<8x128xf32>
    %85 = arith.mulf %82, %84 : vector<8x128xf32>
    %86 = arith.addf %74, %85 : vector<8x128xf32>
    %c7 = arith.constant 7 : index
    %87 = memref.load %arg1[%c7] : memref<20xf32, #tpu.memory_space<smem>>
    %88 = vector.broadcast %87 : f32 to vector<8x128xf32>
    %89 = arith.mulf %0, %88 : vector<8x128xf32>
    %c7_23 = arith.constant 7 : index
    %90 = memref.load %arg2[%c7_23] : memref<20xf32, #tpu.memory_space<smem>>
    %91 = vector.broadcast %90 : f32 to vector<8x128xf32>
    %92 = arith.addf %89, %91 : vector<8x128xf32>
    %cst_24 = arith.constant 0.000000e+00 : f32
    %93 = vector.broadcast %cst_24 : f32 to vector<8x128xf32>
    %94 = arith.maximumf %92, %93 : vector<8x128xf32>
    %c7_25 = arith.constant 7 : index
    %95 = memref.load %arg3[%c7_25] : memref<20xf32, #tpu.memory_space<smem>>
    %96 = vector.broadcast %95 : f32 to vector<8x128xf32>
    %97 = arith.mulf %94, %96 : vector<8x128xf32>
    %98 = arith.addf %86, %97 : vector<8x128xf32>
    %c8 = arith.constant 8 : index
    %99 = memref.load %arg1[%c8] : memref<20xf32, #tpu.memory_space<smem>>
    %100 = vector.broadcast %99 : f32 to vector<8x128xf32>
    %101 = arith.mulf %0, %100 : vector<8x128xf32>
    %c8_26 = arith.constant 8 : index
    %102 = memref.load %arg2[%c8_26] : memref<20xf32, #tpu.memory_space<smem>>
    %103 = vector.broadcast %102 : f32 to vector<8x128xf32>
    %104 = arith.addf %101, %103 : vector<8x128xf32>
    %cst_27 = arith.constant 0.000000e+00 : f32
    %105 = vector.broadcast %cst_27 : f32 to vector<8x128xf32>
    %106 = arith.maximumf %104, %105 : vector<8x128xf32>
    %c8_28 = arith.constant 8 : index
    %107 = memref.load %arg3[%c8_28] : memref<20xf32, #tpu.memory_space<smem>>
    %108 = vector.broadcast %107 : f32 to vector<8x128xf32>
    %109 = arith.mulf %106, %108 : vector<8x128xf32>
    %110 = arith.addf %98, %109 : vector<8x128xf32>
    %c9 = arith.constant 9 : index
    %111 = memref.load %arg1[%c9] : memref<20xf32, #tpu.memory_space<smem>>
    %112 = vector.broadcast %111 : f32 to vector<8x128xf32>
    %113 = arith.mulf %0, %112 : vector<8x128xf32>
    %c9_29 = arith.constant 9 : index
    %114 = memref.load %arg2[%c9_29] : memref<20xf32, #tpu.memory_space<smem>>
    %115 = vector.broadcast %114 : f32 to vector<8x128xf32>
    %116 = arith.addf %113, %115 : vector<8x128xf32>
    %cst_30 = arith.constant 0.000000e+00 : f32
    %117 = vector.broadcast %cst_30 : f32 to vector<8x128xf32>
    %118 = arith.maximumf %116, %117 : vector<8x128xf32>
    %c9_31 = arith.constant 9 : index
    %119 = memref.load %arg3[%c9_31] : memref<20xf32, #tpu.memory_space<smem>>
    %120 = vector.broadcast %119 : f32 to vector<8x128xf32>
    %121 = arith.mulf %118, %120 : vector<8x128xf32>
    %122 = arith.addf %110, %121 : vector<8x128xf32>
    %c10 = arith.constant 10 : index
    %123 = memref.load %arg1[%c10] : memref<20xf32, #tpu.memory_space<smem>>
    %124 = vector.broadcast %123 : f32 to vector<8x128xf32>
    %125 = arith.mulf %0, %124 : vector<8x128xf32>
    %c10_32 = arith.constant 10 : index
    %126 = memref.load %arg2[%c10_32] : memref<20xf32, #tpu.memory_space<smem>>
    %127 = vector.broadcast %126 : f32 to vector<8x128xf32>
    %128 = arith.addf %125, %127 : vector<8x128xf32>
    %cst_33 = arith.constant 0.000000e+00 : f32
    %129 = vector.broadcast %cst_33 : f32 to vector<8x128xf32>
    %130 = arith.maximumf %128, %129 : vector<8x128xf32>
    %c10_34 = arith.constant 10 : index
    %131 = memref.load %arg3[%c10_34] : memref<20xf32, #tpu.memory_space<smem>>
    %132 = vector.broadcast %131 : f32 to vector<8x128xf32>
    %133 = arith.mulf %130, %132 : vector<8x128xf32>
    %134 = arith.addf %122, %133 : vector<8x128xf32>
    %c11 = arith.constant 11 : index
    %135 = memref.load %arg1[%c11] : memref<20xf32, #tpu.memory_space<smem>>
    %136 = vector.broadcast %135 : f32 to vector<8x128xf32>
    %137 = arith.mulf %0, %136 : vector<8x128xf32>
    %c11_35 = arith.constant 11 : index
    %138 = memref.load %arg2[%c11_35] : memref<20xf32, #tpu.memory_space<smem>>
    %139 = vector.broadcast %138 : f32 to vector<8x128xf32>
    %140 = arith.addf %137, %139 : vector<8x128xf32>
    %cst_36 = arith.constant 0.000000e+00 : f32
    %141 = vector.broadcast %cst_36 : f32 to vector<8x128xf32>
    %142 = arith.maximumf %140, %141 : vector<8x128xf32>
    %c11_37 = arith.constant 11 : index
    %143 = memref.load %arg3[%c11_37] : memref<20xf32, #tpu.memory_space<smem>>
    %144 = vector.broadcast %143 : f32 to vector<8x128xf32>
    %145 = arith.mulf %142, %144 : vector<8x128xf32>
    %146 = arith.addf %134, %145 : vector<8x128xf32>
    %c12 = arith.constant 12 : index
    %147 = memref.load %arg1[%c12] : memref<20xf32, #tpu.memory_space<smem>>
    %148 = vector.broadcast %147 : f32 to vector<8x128xf32>
    %149 = arith.mulf %0, %148 : vector<8x128xf32>
    %c12_38 = arith.constant 12 : index
    %150 = memref.load %arg2[%c12_38] : memref<20xf32, #tpu.memory_space<smem>>
    %151 = vector.broadcast %150 : f32 to vector<8x128xf32>
    %152 = arith.addf %149, %151 : vector<8x128xf32>
    %cst_39 = arith.constant 0.000000e+00 : f32
    %153 = vector.broadcast %cst_39 : f32 to vector<8x128xf32>
    %154 = arith.maximumf %152, %153 : vector<8x128xf32>
    %c12_40 = arith.constant 12 : index
    %155 = memref.load %arg3[%c12_40] : memref<20xf32, #tpu.memory_space<smem>>
    %156 = vector.broadcast %155 : f32 to vector<8x128xf32>
    %157 = arith.mulf %154, %156 : vector<8x128xf32>
    %158 = arith.addf %146, %157 : vector<8x128xf32>
    %c13 = arith.constant 13 : index
    %159 = memref.load %arg1[%c13] : memref<20xf32, #tpu.memory_space<smem>>
    %160 = vector.broadcast %159 : f32 to vector<8x128xf32>
    %161 = arith.mulf %0, %160 : vector<8x128xf32>
    %c13_41 = arith.constant 13 : index
    %162 = memref.load %arg2[%c13_41] : memref<20xf32, #tpu.memory_space<smem>>
    %163 = vector.broadcast %162 : f32 to vector<8x128xf32>
    %164 = arith.addf %161, %163 : vector<8x128xf32>
    %cst_42 = arith.constant 0.000000e+00 : f32
    %165 = vector.broadcast %cst_42 : f32 to vector<8x128xf32>
    %166 = arith.maximumf %164, %165 : vector<8x128xf32>
    %c13_43 = arith.constant 13 : index
    %167 = memref.load %arg3[%c13_43] : memref<20xf32, #tpu.memory_space<smem>>
    %168 = vector.broadcast %167 : f32 to vector<8x128xf32>
    %169 = arith.mulf %166, %168 : vector<8x128xf32>
    %170 = arith.addf %158, %169 : vector<8x128xf32>
    %c14 = arith.constant 14 : index
    %171 = memref.load %arg1[%c14] : memref<20xf32, #tpu.memory_space<smem>>
    %172 = vector.broadcast %171 : f32 to vector<8x128xf32>
    %173 = arith.mulf %0, %172 : vector<8x128xf32>
    %c14_44 = arith.constant 14 : index
    %174 = memref.load %arg2[%c14_44] : memref<20xf32, #tpu.memory_space<smem>>
    %175 = vector.broadcast %174 : f32 to vector<8x128xf32>
    %176 = arith.addf %173, %175 : vector<8x128xf32>
    %cst_45 = arith.constant 0.000000e+00 : f32
    %177 = vector.broadcast %cst_45 : f32 to vector<8x128xf32>
    %178 = arith.maximumf %176, %177 : vector<8x128xf32>
    %c14_46 = arith.constant 14 : index
    %179 = memref.load %arg3[%c14_46] : memref<20xf32, #tpu.memory_space<smem>>
    %180 = vector.broadcast %179 : f32 to vector<8x128xf32>
    %181 = arith.mulf %178, %180 : vector<8x128xf32>
    %182 = arith.addf %170, %181 : vector<8x128xf32>
    %c15 = arith.constant 15 : index
    %183 = memref.load %arg1[%c15] : memref<20xf32, #tpu.memory_space<smem>>
    %184 = vector.broadcast %183 : f32 to vector<8x128xf32>
    %185 = arith.mulf %0, %184 : vector<8x128xf32>
    %c15_47 = arith.constant 15 : index
    %186 = memref.load %arg2[%c15_47] : memref<20xf32, #tpu.memory_space<smem>>
    %187 = vector.broadcast %186 : f32 to vector<8x128xf32>
    %188 = arith.addf %185, %187 : vector<8x128xf32>
    %cst_48 = arith.constant 0.000000e+00 : f32
    %189 = vector.broadcast %cst_48 : f32 to vector<8x128xf32>
    %190 = arith.maximumf %188, %189 : vector<8x128xf32>
    %c15_49 = arith.constant 15 : index
    %191 = memref.load %arg3[%c15_49] : memref<20xf32, #tpu.memory_space<smem>>
    %192 = vector.broadcast %191 : f32 to vector<8x128xf32>
    %193 = arith.mulf %190, %192 : vector<8x128xf32>
    %194 = arith.addf %182, %193 : vector<8x128xf32>
    %c16 = arith.constant 16 : index
    %195 = memref.load %arg1[%c16] : memref<20xf32, #tpu.memory_space<smem>>
    %196 = vector.broadcast %195 : f32 to vector<8x128xf32>
    %197 = arith.mulf %0, %196 : vector<8x128xf32>
    %c16_50 = arith.constant 16 : index
    %198 = memref.load %arg2[%c16_50] : memref<20xf32, #tpu.memory_space<smem>>
    %199 = vector.broadcast %198 : f32 to vector<8x128xf32>
    %200 = arith.addf %197, %199 : vector<8x128xf32>
    %cst_51 = arith.constant 0.000000e+00 : f32
    %201 = vector.broadcast %cst_51 : f32 to vector<8x128xf32>
    %202 = arith.maximumf %200, %201 : vector<8x128xf32>
    %c16_52 = arith.constant 16 : index
    %203 = memref.load %arg3[%c16_52] : memref<20xf32, #tpu.memory_space<smem>>
    %204 = vector.broadcast %203 : f32 to vector<8x128xf32>
    %205 = arith.mulf %202, %204 : vector<8x128xf32>
    %206 = arith.addf %194, %205 : vector<8x128xf32>
    %c17 = arith.constant 17 : index
    %207 = memref.load %arg1[%c17] : memref<20xf32, #tpu.memory_space<smem>>
    %208 = vector.broadcast %207 : f32 to vector<8x128xf32>
    %209 = arith.mulf %0, %208 : vector<8x128xf32>
    %c17_53 = arith.constant 17 : index
    %210 = memref.load %arg2[%c17_53] : memref<20xf32, #tpu.memory_space<smem>>
    %211 = vector.broadcast %210 : f32 to vector<8x128xf32>
    %212 = arith.addf %209, %211 : vector<8x128xf32>
    %cst_54 = arith.constant 0.000000e+00 : f32
    %213 = vector.broadcast %cst_54 : f32 to vector<8x128xf32>
    %214 = arith.maximumf %212, %213 : vector<8x128xf32>
    %c17_55 = arith.constant 17 : index
    %215 = memref.load %arg3[%c17_55] : memref<20xf32, #tpu.memory_space<smem>>
    %216 = vector.broadcast %215 : f32 to vector<8x128xf32>
    %217 = arith.mulf %214, %216 : vector<8x128xf32>
    %218 = arith.addf %206, %217 : vector<8x128xf32>
    %c18 = arith.constant 18 : index
    %219 = memref.load %arg1[%c18] : memref<20xf32, #tpu.memory_space<smem>>
    %220 = vector.broadcast %219 : f32 to vector<8x128xf32>
    %221 = arith.mulf %0, %220 : vector<8x128xf32>
    %c18_56 = arith.constant 18 : index
    %222 = memref.load %arg2[%c18_56] : memref<20xf32, #tpu.memory_space<smem>>
    %223 = vector.broadcast %222 : f32 to vector<8x128xf32>
    %224 = arith.addf %221, %223 : vector<8x128xf32>
    %cst_57 = arith.constant 0.000000e+00 : f32
    %225 = vector.broadcast %cst_57 : f32 to vector<8x128xf32>
    %226 = arith.maximumf %224, %225 : vector<8x128xf32>
    %c18_58 = arith.constant 18 : index
    %227 = memref.load %arg3[%c18_58] : memref<20xf32, #tpu.memory_space<smem>>
    %228 = vector.broadcast %227 : f32 to vector<8x128xf32>
    %229 = arith.mulf %226, %228 : vector<8x128xf32>
    %230 = arith.addf %218, %229 : vector<8x128xf32>
    %c19 = arith.constant 19 : index
    %231 = memref.load %arg1[%c19] : memref<20xf32, #tpu.memory_space<smem>>
    %232 = vector.broadcast %231 : f32 to vector<8x128xf32>
    %233 = arith.mulf %0, %232 : vector<8x128xf32>
    %c19_59 = arith.constant 19 : index
    %234 = memref.load %arg2[%c19_59] : memref<20xf32, #tpu.memory_space<smem>>
    %235 = vector.broadcast %234 : f32 to vector<8x128xf32>
    %236 = arith.addf %233, %235 : vector<8x128xf32>
    %cst_60 = arith.constant 0.000000e+00 : f32
    %237 = vector.broadcast %cst_60 : f32 to vector<8x128xf32>
    %238 = arith.maximumf %236, %237 : vector<8x128xf32>
    %c19_61 = arith.constant 19 : index
    %239 = memref.load %arg3[%c19_61] : memref<20xf32, #tpu.memory_space<smem>>
    %240 = vector.broadcast %239 : f32 to vector<8x128xf32>
    %241 = arith.mulf %238, %240 : vector<8x128xf32>
    %242 = arith.addf %230, %241 : vector<8x128xf32>
    %c0_62 = arith.constant 0 : index
    %c0_63 = arith.constant 0 : index
    %243 = vector.load %arg6[%c0_62, %c0_63] : memref<8x128xf32, #tpu.memory_space<vmem>>, vector<8x128xf32>
    tpu.vector_store %arg6[%c0_62, %c0_63], %242 {strides = array<i32>} : memref<8x128xf32, #tpu.memory_space<vmem>>, vector<8x128xf32>,
    return
  }
  func.func @transform_0(%arg0: i32) -> i32 {
    %c0_i32 = arith.constant 0 : i32
    %c0_i32_0 = arith.constant 0 : i32
    return %c0_i32 : i32
  }
  func.func @transform_1(%arg0: i32) -> i32 {
    %c0_i32 = arith.constant 0 : i32
    %c0_i32_0 = arith.constant 0 : i32
    return %c0_i32 : i32
  }
  func.func @transform_2(%arg0: i32) -> i32 {
    %c0_i32 = arith.constant 0 : i32
    %c0_i32_0 = arith.constant 0 : i32
    return %c0_i32 : i32
  }
  func.func @transform_3(%arg0: i32) -> i32 {
    %c0_i32 = arith.constant 0 : i32
    %c0_i32_0 = arith.constant 0 : i32
    return %c0_i32 : i32
  }
  func.func @transform_4(%arg0: i32) -> (i32, i32) {
    %c0_i32 = arith.constant 0 : i32
    %c0_i32_0 = arith.constant 0 : i32
    return %arg0, %c0_i32 : i32, i32
  }
  func.func @transform_5(%arg0: i32) -> (i32, i32) {
    %c0_i32 = arith.constant 0 : i32
    %c0_i32_0 = arith.constant 0 : i32
    return %arg0, %c0_i32 : i32, i32
  }
}

</mosaic_0001>

<llo_original>
// kernel: mlp_forward.1
$region0: #{mlp_forward.1}
  #allocation0 [shape = 'u32[]', space=smem, size = 0x4, offset = 0x4, fixed_abs, tag = 'smem constant byte address 0x4 - core index']
  #allocation1 [shape = 'u32[144,128]{1,0:T(1,128)}', space=vmem, size = 0x12000, scoped, tag = 'internal scratch']
  #allocation2 [shape = 'f32[1]{0:T(128)S(6)}', space=smem, size = 0x200, scoped, tag = 'scoped memory for mlp_forward.1']
  %s0 = inlined_call_operand.vmem [shape: f32[20], index: 0, kind: input, shape index: {}]
  %s1 = inlined_call_operand.vmem [shape: f32[20], index: 1, kind: input, shape index: {}]
  %s2 = inlined_call_operand.vmem [shape: f32[20], index: 2, kind: input, shape index: {}]
  %s3 = inlined_call_operand.<no memory space> [shape: f32[1], index: 3, kind: input, shape index: {}]
  %s4 = inlined_call_operand.vmem [shape: f32[8,128], index: 4, kind: input, shape index: {}]
  %s5 = inlined_call_operand.hbm [shape: f32[8,128], index: 5, kind: output, shape index: {}]
  %s6 = sld [smem:[#allocation0]]
  $region42: #{mlp_forward.1} parent=0
    _
  %s8 = ssub.s32 1, %s6
  %s9 = scalar_select 0, %s8, %s6
  %10 = sst [smem:[#allocation2]] %s3
  $region1: #{mlp_forward.1} parent=0
    #allocation3 [shape = 'u8[512]{0}', space=smem, size = 0x200, scoped, tag = 'input window, operand 0, single buffered']
    #allocation4 [shape = 's32[1]{0}', space=sflag, size = 0x4, scoped, tag = 'scoped memory for mlp_forward.1']
    #allocation5 [shape = 's32[1]{0}', space=sflag, size = 0x4, scoped, tag = 'scoped memory for mlp_forward.1']
    #allocation6 [shape = 'u8[512]{0}', space=smem, size = 0x200, scoped, tag = 'input window, operand 1, single buffered']
    #allocation7 [shape = 's32[1]{0}', space=sflag, size = 0x4, scoped, tag = 'scoped memory for mlp_forward.1']
    #allocation8 [shape = 'u8[512]{0}', space=smem, size = 0x200, scoped, tag = 'input window, operand 2, single buffered']
    #allocation9 [shape = 'u8[4096]{0}', space=vmem, size = 0x1000, scoped, tag = 'output window, operand 0, single buffered']
    %11 = vsyncpa [#allocation5], 0
    %12 = vsyncpa [#allocation7], 0
    %13 = vsyncpa [#allocation4], 0
    // Predicated region
    $region2: #{mlp_forward.1} parent=1 // pred_check
      _
    $region3: #{mlp_forward.1} parent=1 // pred_check_branch
      %15 = sbr.rel (0) target = $region5
    $region4: #{mlp_forward.1} parent=1 // pred_region
      %s17 = ssub.s32 16, 16
      %18 = vsyncadd [#allocation5], %s17
      %s20 = sshll.u32 %s0, 4
      %s21 = int_to_ptr.vmem [resolvable:$true] %s20
      %23 = dma.vmem_to_smem %s21, 16, [#allocation3], [#allocation5]
    $region5: #{mlp_forward.1} parent=1 // pred_fallthru
      _
    // Predicated region
    $region6: #{mlp_forward.1} parent=1 // pred_check
      _
    $region7: #{mlp_forward.1} parent=1 // pred_check_branch
      %25 = sbr.rel (0) target = $region9
    $region8: #{mlp_forward.1} parent=1 // pred_region
      %s27 = ssub.s32 16, 16
      %28 = vsyncadd [#allocation7], %s27
      %s30 = sshll.u32 %s1, 4
      %s31 = int_to_ptr.vmem [resolvable:$true] %s30
      %33 = dma.vmem_to_smem %s31, 16, [#allocation6], [#allocation7]
    $region9: #{mlp_forward.1} parent=1 // pred_fallthru
      _
    // Predicated region
    $region10: #{mlp_forward.1} parent=1 // pred_check
      _
    $region11: #{mlp_forward.1} parent=1 // pred_check_branch
      %35 = sbr.rel (0) target = $region13
    $region12: #{mlp_forward.1} parent=1 // pred_region
      %s37 = ssub.s32 16, 16
      %38 = vsyncadd [#allocation7], %s37
      %s40 = sshll.u32 %s2, 4
      %s41 = int_to_ptr.vmem [resolvable:$true] %s40
      %43 = dma.vmem_to_smem %s41, 16, [#allocation8], [#allocation7]
    $region13: #{mlp_forward.1} parent=1 // pred_fallthru
      _
    // Predicated region
    $region14: #{mlp_forward.1} parent=1 // pred_check
      _
    $region15: #{mlp_forward.1} parent=1 // pred_check_branch
      %45 = sbr.rel (0) target = $region17
    $region16: #{mlp_forward.1} parent=1 // pred_region
      _
    $region17: #{mlp_forward.1} parent=1 // pred_fallthru
      _
    // Predicated region
    $region18: #{mlp_forward.1} parent=1 // pred_check
      _
    $region19: #{mlp_forward.1} parent=1 // pred_check_branch
      %47 = sbr.rel (0) target = $region21
    $region20: #{mlp_forward.1} parent=1 // pred_region
      _
    $region21: #{mlp_forward.1} parent=1 // pred_fallthru
      _
    // Predicated region
    $region22: #{mlp_forward.1} parent=1 // pred_check
      _
    $region23: #{mlp_forward.1} parent=1 // pred_check_branch
      %49 = sbr.rel (0) target = $region25
    $region24: #{mlp_forward.1} parent=1 // pred_region
      %50 = dma.done [#allocation5], 16
    $region25: #{mlp_forward.1} parent=1 // pred_fallthru
      _
    // Predicated region
    $region26: #{mlp_forward.1} parent=1 // pred_check
      _
    $region27: #{mlp_forward.1} parent=1 // pred_check_branch
      %52 = sbr.rel (0) target = $region29
    $region28: #{mlp_forward.1} parent=1 // pred_region
      %53 = dma.done [#allocation7], 16
    $region29: #{mlp_forward.1} parent=1 // pred_fallthru
      _
    // Predicated region
    $region30: #{mlp_forward.1} parent=1 // pred_check
      _
    $region31: #{mlp_forward.1} parent=1 // pred_check_branch
      %55 = sbr.rel (0) target = $region33
    $region32: #{mlp_forward.1} parent=1 // pred_region
      %56 = dma.done [#allocation7], 16
    $region33: #{mlp_forward.1} parent=1 // pred_fallthru
      _
    %57 = sfence
    %v58 = vld [vmem:[%s4] sm:$0xff]
    %s59 = sld [smem:[#allocation2]]
    %v60 = vstv %s59
    %s61 = sld [smem:[#allocation3]]
    %v62 = vstv %s61
    %v63 = vmul.f32 %v58, %v62
    %s64 = sld [smem:[#allocation6]]
    %v65 = vstv %s64
    %v66 = vadd.f32 %v63, %v65
    %v67 = vmax.f32 %v66, 0.0
    %s68 = sld [smem:[#allocation8]]
    %v69 = vstv %s68
    %v70 = vmul.f32 %v67, %v69
    %v71 = vadd.f32 %v60, %v70
    %s72 = sld [smem:[#allocation3 + $0x1]]
    %v73 = vstv %s72
    %v74 = vmul.f32 %v58, %v73
    %s75 = sld [smem:[#allocation6 + $0x1]]
    %v76 = vstv %s75
    %v77 = vadd.f32 %v74, %v76
    %v78 = vmax.f32 %v77, 0.0
    %s79 = sld [smem:[#allocation8 + $0x1]]
    %v80 = vstv %s79
    %v81 = vmul.f32 %v78, %v80
    %v82 = vadd.f32 %v71, %v81
    %s83 = sld [smem:[#allocation3 + $0x2]]
    %v84 = vstv %s83
    %v85 = vmul.f32 %v58, %v84
    %s86 = sld [smem:[#allocation6 + $0x2]]
    %v87 = vstv %s86
    %v88 = vadd.f32 %v85, %v87
    %v89 = vmax.f32 %v88, 0.0
    %s90 = sld [smem:[#allocation8 + $0x2]]
    %v91 = vstv %s90
    %v92 = vmul.f32 %v89, %v91
    %v93 = vadd.f32 %v82, %v92
    %s94 = sld [smem:[#allocation3 + $0x3]]
    %v95 = vstv %s94
    %v96 = vmul.f32 %v58, %v95
    %s97 = sld [smem:[#allocation6 + $0x3]]
    %v98 = vstv %s97
    %v99 = vadd.f32 %v96, %v98
    %v100 = vmax.f32 %v99, 0.0
    %s101 = sld [smem:[#allocation8 + $0x3]]
    %v102 = vstv %s101
    %v103 = vmul.f32 %v100, %v102
    %v104 = vadd.f32 %v93, %v103
    %s105 = sld [smem:[#allocation3 + $0x4]]
    %v106 = vstv %s105
    %v107 = vmul.f32 %v58, %v106
    %s108 = sld [smem:[#allocation6 + $0x4]]
    %v109 = vstv %s108
    %v110 = vadd.f32 %v107, %v109
    %v111 = vmax.f32 %v110, 0.0
    %s112 = sld [smem:[#allocation8 + $0x4]]
    %v113 = vstv %s112
    %v114 = vmul.f32 %v111, %v113
    %v115 = vadd.f32 %v104, %v114
    %s116 = sld [smem:[#allocation3 + $0x5]]
    %v117 = vstv %s116
    %v118 = vmul.f32 %v58, %v117
    %s119 = sld [smem:[#allocation6 + $0x5]]
    %v120 = vstv %s119
    %v121 = vadd.f32 %v118, %v120
    %v122 = vmax.f32 %v121, 0.0
    %s123 = sld [smem:[#allocation8 + $0x5]]
    %v124 = vstv %s123
    %v125 = vmul.f32 %v122, %v124
    %v126 = vadd.f32 %v115, %v125
    %s127 = sld [smem:[#allocation3 + $0x6]]
    %v128 = vstv %s127
    %v129 = vmul.f32 %v58, %v128
    %s130 = sld [smem:[#allocation6 + $0x6]]
    %v131 = vstv %s130
    %v132 = vadd.f32 %v129, %v131
    %v133 = vmax.f32 %v132, 0.0
    %s134 = sld [smem:[#allocation8 + $0x6]]
    %v135 = vstv %s134
    %v136 = vmul.f32 %v133, %v135
    %v137 = vadd.f32 %v126, %v136
    %s138 = sld [smem:[#allocation3 + $0x7]]
    %v139 = vstv %s138
    %v140 = vmul.f32 %v58, %v139
    %s141 = sld [smem:[#allocation6 + $0x7]]
    %v142 = vstv %s141
    %v143 = vadd.f32 %v140, %v142
    %v144 = vmax.f32 %v143, 0.0
    %s145 = sld [smem:[#allocation8 + $0x7]]
    %v146 = vstv %s145
    %v147 = vmul.f32 %v144, %v146
    %v148 = vadd.f32 %v137, %v147
    %s149 = sld [smem:[#allocation3 + $0x8]]
    %v150 = vstv %s149
    %v151 = vmul.f32 %v58, %v150
    %s152 = sld [smem:[#allocation6 + $0x8]]
    %v153 = vstv %s152
    %v154 = vadd.f32 %v151, %v153
    %v155 = vmax.f32 %v154, 0.0
    %s156 = sld [smem:[#allocation8 + $0x8]]
    %v157 = vstv %s156
    %v158 = vmul.f32 %v155, %v157
    %v159 = vadd.f32 %v148, %v158
    %s160 = sld [smem:[#allocation3 + $0x9]]
    %v161 = vstv %s160
    %v162 = vmul.f32 %v58, %v161
    %s163 = sld [smem:[#allocation6 + $0x9]]
    %v164 = vstv %s163
    %v165 = vadd.f32 %v162, %v164
    %v166 = vmax.f32 %v165, 0.0
    %s167 = sld [smem:[#allocation8 + $0x9]]
    %v168 = vstv %s167
    %v169 = vmul.f32 %v166, %v168
    %v170 = vadd.f32 %v159, %v169
    %s171 = sld [smem:[#allocation3 + $0xa]]
    %v172 = vstv %s171
    %v173 = vmul.f32 %v58, %v172
    %s174 = sld [smem:[#allocation6 + $0xa]]
    %v175 = vstv %s174
    %v176 = vadd.f32 %v173, %v175
    %v177 = vmax.f32 %v176, 0.0
    %s178 = sld [smem:[#allocation8 + $0xa]]
    %v179 = vstv %s178
    %v180 = vmul.f32 %v177, %v179
    %v181 = vadd.f32 %v170, %v180
    %s182 = sld [smem:[#allocation3 + $0xb]]
    %v183 = vstv %s182
    %v184 = vmul.f32 %v58, %v183
    %s185 = sld [smem:[#allocation6 + $0xb]]
    %v186 = vstv %s185
    %v187 = vadd.f32 %v184, %v186
    %v188 = vmax.f32 %v187, 0.0
    %s189 = sld [smem:[#allocation8 + $0xb]]
    %v190 = vstv %s189
    %v191 = vmul.f32 %v188, %v190
    %v192 = vadd.f32 %v181, %v191
    %s193 = sld [smem:[#allocation3 + $0xc]]
    %v194 = vstv %s193
    %v195 = vmul.f32 %v58, %v194
    %s196 = sld [smem:[#allocation6 + $0xc]]
    %v197 = vstv %s196
    %v198 = vadd.f32 %v195, %v197
    %v199 = vmax.f32 %v198, 0.0
    %s200 = sld [smem:[#allocation8 + $0xc]]
    %v201 = vstv %s200
    %v202 = vmul.f32 %v199, %v201
    %v203 = vadd.f32 %v192, %v202
    %s204 = sld [smem:[#allocation3 + $0xd]]
    %v205 = vstv %s204
    %v206 = vmul.f32 %v58, %v205
    %s207 = sld [smem:[#allocation6 + $0xd]]
    %v208 = vstv %s207
    %v209 = vadd.f32 %v206, %v208
    %v210 = vmax.f32 %v209, 0.0
    %s211 = sld [smem:[#allocation8 + $0xd]]
    %v212 = vstv %s211
    %v213 = vmul.f32 %v210, %v212
    %v214 = vadd.f32 %v203, %v213
    %s215 = sld [smem:[#allocation3 + $0xe]]
    %v216 = vstv %s215
    %v217 = vmul.f32 %v58, %v216
    %s218 = sld [smem:[#allocation6 + $0xe]]
    %v219 = vstv %s218
    %v220 = vadd.f32 %v217, %v219
    %v221 = vmax.f32 %v220, 0.0
    %s222 = sld [smem:[#allocation8 + $0xe]]
    %v223 = vstv %s222
    %v224 = vmul.f32 %v221, %v223
    %v225 = vadd.f32 %v214, %v224
    %s226 = sld [smem:[#allocation3 + $0xf]]
    %v227 = vstv %s226
    %v228 = vmul.f32 %v58, %v227
    %s229 = sld [smem:[#allocation6 + $0xf]]
    %v230 = vstv %s229
    %v231 = vadd.f32 %v228, %v230
    %v232 = vmax.f32 %v231, 0.0
    %s233 = sld [smem:[#allocation8 + $0xf]]
    %v234 = vstv %s233
    %v235 = vmul.f32 %v232, %v234
    %v236 = vadd.f32 %v225, %v235
    %s237 = sld [smem:[#allocation3 + $0x10]]
    %v238 = vstv %s237
    %v239 = vmul.f32 %v58, %v238
    %s240 = sld [smem:[#allocation6 + $0x10]]
    %v241 = vstv %s240
    %v242 = vadd.f32 %v239, %v241
    %v243 = vmax.f32 %v242, 0.0
    %s244 = sld [smem:[#allocation8 + $0x10]]
    %v245 = vstv %s244
    %v246 = vmul.f32 %v243, %v245
    %v247 = vadd.f32 %v236, %v246
    %s248 = sld [smem:[#allocation3 + $0x11]]
    %v249 = vstv %s248
    %v250 = vmul.f32 %v58, %v249
    %s251 = sld [smem:[#allocation6 + $0x11]]
    %v252 = vstv %s251
    %v253 = vadd.f32 %v250, %v252
    %v254 = vmax.f32 %v253, 0.0
    %s255 = sld [smem:[#allocation8 + $0x11]]
    %v256 = vstv %s255
    %v257 = vmul.f32 %v254, %v256
    %v258 = vadd.f32 %v247, %v257
    %s259 = sld [smem:[#allocation3 + $0x12]]
    %v260 = vstv %s259
    %v261 = vmul.f32 %v58, %v260
    %s262 = sld [smem:[#allocation6 + $0x12]]
    %v263 = vstv %s262
    %v264 = vadd.f32 %v261, %v263
    %v265 = vmax.f32 %v264, 0.0
    %s266 = sld [smem:[#allocation8 + $0x12]]
    %v267 = vstv %s266
    %v268 = vmul.f32 %v265, %v267
    %v269 = vadd.f32 %v258, %v268
    %s270 = sld [smem:[#allocation3 + $0x13]]
    %v271 = vstv %s270
    %v272 = vmul.f32 %v58, %v271
    %s273 = sld [smem:[#allocation6 + $0x13]]
    %v274 = vstv %s273
    %v275 = vadd.f32 %v272, %v274
    %v276 = vmax.f32 %v275, 0.0
    %s277 = sld [smem:[#allocation8 + $0x13]]
    %v278 = vstv %s277
    %v279 = vmul.f32 %v276, %v278
    %v280 = vadd.f32 %v269, %v279
    %281 = vst [vmem:[#allocation9] sm:$0xff] %v280
    // Predicated region
    $region34: #{mlp_forward.1} parent=1 // pred_check
      _
    $region35: #{mlp_forward.1} parent=1 // pred_check_branch
      %283 = sbr.rel (0) target = $region37
    $region36: #{mlp_forward.1} parent=1 // pred_region
      %s285 = ssub.s32 128, 128
      %286 = vsyncadd [#allocation4], %s285
      %s288 = sshll.u32 [#allocation9], 4
      %s289 = int_to_ptr.vmem [resolvable:$true] %s288
      %291 = dma.vmem_to_hbm [thread:$0]  %s289, 128, %s5, [#allocation4]
    $region37: #{mlp_forward.1} parent=1 // pred_fallthru
      _
    // Predicated region
    $region38: #{mlp_forward.1} parent=1 // pred_check
      _
    $region39: #{mlp_forward.1} parent=1 // pred_check_branch
      %293 = sbr.rel (0) target = $region41
    $region40: #{mlp_forward.1} parent=1 // pred_region
      %294 = dma.done [#allocation4], 128
    $region41: #{mlp_forward.1} parent=1 // pred_fallthru
      _
    %295 = vsyncpa [#allocation4], 1
    %296 = vsyncpa [#allocation5], 1
    %297 = vsyncpa [#allocation7], 1

</llo_original>
